<compile_context>
chip_gen: v7x
topology: tpu7x:2x2x1
jax: 0.10.0
libtpu: 0.0.40
codegen_flags: <defaults>
</compile_context>

<pallas_src>
import functools
import math

import numpy as np
import jax
import jax.numpy as jnp
from jax import lax
from jax.experimental import pallas as pl
from jax.experimental.pallas import tpu as pltpu

_LANE = 128
_SUBLANE = 8


def _cdiv(a, b):
    return -(-a // b)


def _round_up(a, b):
    return _cdiv(a, b) * b


def _pearson_moments_kernel(x_ref, y_ref, out_ref,
                            sx_ref, sy_ref, sxy_ref, sxx_ref, syy_ref,
                            *, n_flat_tiles, flat_len, tile_flat, acc_w,
                            n_chunks):
    """Accumulate raw moments of a (row_tile, tile_flat) stream.

    Grid = (row_tiles [parallel], flat_tiles [arbitrary, reduction]).
    Accumulators stay full tile width in the hot loop (plain vreg adds); the
    cross-chunk fold down to `acc_w` lanes happens once per row tile.
    """
    s = pl.program_id(1)

    @pl.when(s == 0)
    def _init():
        sx_ref[...] = jnp.zeros_like(sx_ref)
        sy_ref[...] = jnp.zeros_like(sy_ref)
        sxy_ref[...] = jnp.zeros_like(sxy_ref)
        sxx_ref[...] = jnp.zeros_like(sxx_ref)
        syy_ref[...] = jnp.zeros_like(syy_ref)

    def _accum(x, y):
        sx_ref[...] += x
        sy_ref[...] += y
        sxy_ref[...] += x * y
        sxx_ref[...] += x * x
        syy_ref[...] += y * y

    x = x_ref[...].astype(jnp.float32)   # bf16/f16 tiles are cast in-VMEM
    y = y_ref[...].astype(jnp.float32)

    tail_valid = flat_len - (n_flat_tiles - 1) * tile_flat   # static int
    if tail_valid < tile_flat:
        # Ragged tail: mask out-of-range lanes (zeros leave raw moments exact).
        @pl.when(s == n_flat_tiles - 1)
        def _accum_tail():
            col = lax.broadcasted_iota(jnp.int32, x.shape, 1)
            keep = col < tail_valid
            _accum(jnp.where(keep, x, 0.0), jnp.where(keep, y, 0.0))

        @pl.when(s != n_flat_tiles - 1)
        def _accum_body():
            _accum(x, y)
    else:
        _accum(x, y)

    @pl.when(s == n_flat_tiles - 1)
    def _finalize():
        # Tree-fold each accumulator from width n_chunks*acc_w down to acc_w.
        # Static, lane-aligned slices; folding preserves lane % n_block because
        # every fold offset is a multiple of acc_w (itself a multiple of K).
        for i, ref in enumerate((sx_ref, sy_ref, sxy_ref, sxx_ref, syy_ref)):
            n = n_chunks
            while n > 1:
                h = (n + 1) // 2
                lo_w = (n - h) * acc_w
                ref[:, :lo_w] += ref[:, h * acc_w:n * acc_w]
                n = h
            out_ref[:, i * acc_w:(i + 1) * acc_w] = ref[:, :acc_w]


def pearson_loss(output, y, *, flat_tile=None):
    """JAX/Pallas port of pearsonLoss.forward(output, y)."""
    output = jnp.asarray(output)
    y = jnp.asarray(y)
    if output.shape != y.shape:
        raise ValueError("output and y must have the same shape")
    if not jnp.issubdtype(output.dtype, jnp.floating):
        output = output.astype(jnp.float32)
    if not jnp.issubdtype(y.dtype, jnp.floating):
        y = y.astype(jnp.float32)

    if output.ndim == 2:
        n_batch, n_sample = output.shape
        n_block = 1
    elif output.ndim == 3:
        n_batch, n_sample, n_block = output.shape
    else:
        raise ValueError("expected a 2-D or 3-D input")

    # Free row-major views (no HBM traffic): (B, S, K) -> (B, S*K).
    flat_len = n_sample * n_block
    x2 = output.reshape(n_batch, flat_len)
    y2 = y.reshape(n_batch, flat_len)

    # Accumulator lane width: lcm(K, 128) so lanes stay 128-aligned and
    # lane % K recovers the block index after the fold.
    acc_w = n_block * _LANE // math.gcd(n_block, _LANE)

    # --- row (batch) tiling: "parallel" grid axis --------------------------
    if n_batch <= _SUBLANE:
        tb = n_batch                      # full dim, allowed by the (8,128) rule
    else:
        # >=2 row tiles so both v7x TensorCores get work; cap to bound VMEM.
        tb = min(64, _round_up(_cdiv(n_batch, 2), _SUBLANE))
    n_row_tiles = _cdiv(n_batch, tb)
    padded_tb = _round_up(tb, _SUBLANE)   # physical sublane footprint

    # --- flat (sample*block) tiling: byte-budgeted streamed tile -----------
    itemsize = x2.dtype.itemsize
    try:
        vmem_cap = int(pltpu.get_tpu_info().vmem_capacity_bytes)
    except Exception:                     # pragma: no cover - conservative default
        vmem_cap = 64 << 20
    # Working set per flat lane: 2 inputs x 2 pipeline buffers + 5 f32 accs.
    budget = min(vmem_cap // 3, 32 << 20)
    per_lane_bytes = padded_tb * (2 * 2 * itemsize + 5 * 4)
    tf = max(acc_w, (budget // per_lane_bytes) // acc_w * acc_w)
    tf = min(tf, _round_up(flat_len, acc_w))
    if flat_tile is not None:
        tf = min(_round_up(int(flat_tile), acc_w), _round_up(flat_len, acc_w))
    n_chunks = tf // acc_w
    n_flat_tiles = _cdiv(flat_len, tf)

    out_w = 5 * acc_w
    needed = (2 * 2 * padded_tb * tf * itemsize        # double-buffered inputs
              + 5 * padded_tb * tf * 4                 # accumulators
              + 2 * padded_tb * _round_up(out_w, _LANE) * 4)
    vmem_limit = min(max(32 << 20, needed + (8 << 20)),
                     max(32 << 20, vmem_cap - (16 << 20)))

    kernel = functools.partial(
        _pearson_moments_kernel,
        n_flat_tiles=n_flat_tiles, flat_len=flat_len, tile_flat=tf,
        acc_w=acc_w, n_chunks=n_chunks)

    moments = pl.pallas_call(
        kernel,
        out_shape=jax.ShapeDtypeStruct((n_batch, out_w), jnp.float32),
        grid_spec=pltpu.PrefetchScalarGridSpec(
            num_scalar_prefetch=0,
            grid=(n_row_tiles, n_flat_tiles),
            in_specs=[pl.BlockSpec((tb, tf), lambda r, s: (r, s)),
                      pl.BlockSpec((tb, tf), lambda r, s: (r, s))],
            out_specs=pl.BlockSpec((tb, out_w), lambda r, s: (r, 0)),
            scratch_shapes=[pltpu.VMEM((tb, tf), jnp.float32)
                            for _ in range(5)],
        ),
        compiler_params=pltpu.CompilerParams(
            dimension_semantics=("parallel", "arbitrary"),
            vmem_limit_bytes=int(vmem_limit)),
    )(x2, y2)

    # --- tiny wrapper-side epilogue: (B, 5*ACC_W) -> scalar loss ------------
    acc = moments.reshape(n_batch, 5, acc_w)

    def _per_block(i):
        # lane p holds the partial sum of samples with block index p % K
        return acc[:, i, :].reshape(n_batch, acc_w // n_block, n_block).sum(axis=1)

    sx, sy, sxy, sxx, syy = (_per_block(i) for i in range(5))
    n = jnp.float32(n_sample)
    top = sxy - sx * sy / n
    vx = sxx - sx * sx / n
    vy = syy - sy * sy / n
    denom = jnp.sqrt(jnp.maximum(vx * vy, 0.0))   # guard tiny negative rounding
    corr = jnp.abs(top) / denom
    return jnp.mean(corr)


def _pearson_ref(output, y):
    """Pure-JAX mirror of the PyTorch pearsonLoss.forward (two-pass)."""
    output = jnp.asarray(output, jnp.float32)
    y = jnp.asarray(y, jnp.float32)
    if output.ndim == 2:
        output = output[..., None]
        y = y[..., None]
    om = jnp.mean(output, axis=1, keepdims=True)
    ym = jnp.mean(y, axis=1, keepdims=True)
    top = jnp.sum((output - om) * (y - ym), axis=1)
    bottom = jnp.sqrt(jnp.sum((output - om) ** 2, axis=1)
                      * jnp.sum((y - ym) ** 2, axis=1))
    return jnp.mean(jnp.abs(top / bottom))


if __name__ == "__main__":
    key = jax.random.PRNGKey(0)
    ks = jax.random.split(key, 8)

    # 3-D (batch, sample, block); K=3 -> ACC_W = lcm(3,128) = 384, and the
    # forced small flat tile gives a multi-step reduction with a masked tail.
    B, S, K = 2, 380, 3
    o3 = jax.random.normal(ks[0], (B, S, K), dtype=jnp.float32)
    t3 = 0.5 * o3 + jax.random.normal(ks[1], (B, S, K), dtype=jnp.float32)
    got3 = jax.block_until_ready(pearson_loss(o3, t3, flat_tile=768))
    np.testing.assert_allclose(float(got3), float(_pearson_ref(o3, t3)),
                               rtol=1e-4, atol=1e-5)

    # 2-D (batch, sample), sample count not a multiple of 128: masked in-kernel,
    # no pad / no extra HBM copy; small flat tile -> 2 streamed steps.
    B2, S2 = 5, 200
    o2 = jax.random.normal(ks[2], (B2, S2), dtype=jnp.float32)
    t2 = -0.3 * o2 + jax.random.normal(ks[3], (B2, S2), dtype=jnp.float32)
    got2 = jax.block_until_ready(pearson_loss(o2, t2, flat_tile=128))
    np.testing.assert_allclose(float(got2), float(_pearson_ref(o2, t2)),
                               rtol=1e-4, atol=1e-5)

    # batch > 8: exercises the row-tiled "parallel" grid axis with a ragged
    # last row tile (discarded on write-back).
    B3, S3, K3 = 12, 64, 2
    o4 = jax.random.normal(ks[4], (B3, S3, K3), dtype=jnp.float32)
    t4 = 0.8 * o4 + 0.5 * jax.random.normal(ks[5], (B3, S3, K3), dtype=jnp.float32)
    got4 = jax.block_until_ready(pearson_loss(o4, t4))
    np.testing.assert_allclose(float(got4), float(_pearson_ref(o4, t4)),
                               rtol=1e-4, atol=1e-5)

    # bf16 inputs are streamed at native width and cast to f32 per tile.
    o5 = jax.random.normal(ks[6], (2, 256, 4), dtype=jnp.float32).astype(jnp.bfloat16)
    t5 = (0.5 * o5.astype(jnp.float32)
          + jax.random.normal(ks[7], (2, 256, 4), dtype=jnp.float32)).astype(jnp.bfloat16)
    got5 = jax.block_until_ready(pearson_loss(o5, t5))
    np.testing.assert_allclose(float(got5), float(_pearson_ref(o5, t5)),
                               rtol=1e-2, atol=1e-3)

    print("KERNEL_OK")
</pallas_src>

<mosaic_0001>
module attributes {stable_mosaic.version = 11 : i64} {
  func.func @_pearson_moments_kernel(%arg0: i32, %arg1: i32, %arg2: memref<2x768xf32, #tpu.memory_space<vmem>>, %arg3: memref<2x768xf32, #tpu.memory_space<vmem>>, %arg4: memref<2x1920xf32, #tpu.memory_space<vmem>>, %arg5: memref<2x768xf32, #tpu.memory_space<vmem>>, %arg6: memref<2x768xf32, #tpu.memory_space<vmem>>, %arg7: memref<2x768xf32, #tpu.memory_space<vmem>>, %arg8: memref<2x768xf32, #tpu.memory_space<vmem>>, %arg9: memref<2x768xf32, #tpu.memory_space<vmem>>) attributes {dimension_semantics = [#tpu.dimension_semantics<parallel>, #tpu.dimension_semantics<arbitrary>], iteration_bounds = array<i64: 1, 2>, scalar_prefetch = 0 : i64, scratch_operands = 5 : i64, tpu.core_type = #tpu.core_type<tc>, window_params = [{transform_indices = @transform_0, window_bounds = array<i64: 2, 768>}, {transform_indices = @transform_1, window_bounds = array<i64: 2, 768>}, {transform_indices = @transform_2, window_bounds = array<i64: 2, 1920>}]} {
    %c0_i32 = arith.constant 0 : i32
    %0 = arith.cmpi eq, %arg1, %c0_i32 : i32
    %1 = arith.extui %0 : i1 to i32
    %c0_i32_0 = arith.constant 0 : i32
    %2 = arith.cmpi ne, %1, %c0_i32_0 : i32
    scf.if %2 {
      %cst = arith.constant 0.000000e+00 : f32
      %14 = vector.broadcast %cst : f32 to vector<2x768xf32>
      %c0_9 = arith.constant 0 : index
      %c0_10 = arith.constant 0 : index
      %15 = vector.load %arg5[%c0_9, %c0_10] : memref<2x768xf32, #tpu.memory_space<vmem>>, vector<2x768xf32>
      tpu.vector_store %arg5[%c0_9, %c0_10], %14 {strides = array<i32>} : memref<2x768xf32, #tpu.memory_space<vmem>>, vector<2x768xf32>,
      %cst_11 = arith.constant 0.000000e+00 : f32
      %16 = vector.broadcast %cst_11 : f32 to vector<2x768xf32>
      %c0_12 = arith.constant 0 : index
      %c0_13 = arith.constant 0 : index
      %17 = vector.load %arg6[%c0_12, %c0_13] : memref<2x768xf32, #tpu.memory_space<vmem>>, vector<2x768xf32>
      tpu.vector_store %arg6[%c0_12, %c0_13], %16 {strides = array<i32>} : memref<2x768xf32, #tpu.memory_space<vmem>>, vector<2x768xf32>,
      %cst_14 = arith.constant 0.000000e+00 : f32
      %18 = vector.broadcast %cst_14 : f32 to vector<2x768xf32>
      %c0_15 = arith.constant 0 : index
      %c0_16 = arith.constant 0 : index
      %19 = vector.load %arg7[%c0_15, %c0_16] : memref<2x768xf32, #tpu.memory_space<vmem>>, vector<2x768xf32>
      tpu.vector_store %arg7[%c0_15, %c0_16], %18 {strides = array<i32>} : memref<2x768xf32, #tpu.memory_space<vmem>>, vector<2x768xf32>,
      %cst_17 = arith.constant 0.000000e+00 : f32
      %20 = vector.broadcast %cst_17 : f32 to vector<2x768xf32>
      %c0_18 = arith.constant 0 : index
      %c0_19 = arith.constant 0 : index
      %21 = vector.load %arg8[%c0_18, %c0_19] : memref<2x768xf32, #tpu.memory_space<vmem>>, vector<2x768xf32>
      tpu.vector_store %arg8[%c0_18, %c0_19], %20 {strides = array<i32>} : memref<2x768xf32, #tpu.memory_space<vmem>>, vector<2x768xf32>,
      %cst_20 = arith.constant 0.000000e+00 : f32
      %22 = vector.broadcast %cst_20 : f32 to vector<2x768xf32>
      %c0_21 = arith.constant 0 : index
      %c0_22 = arith.constant 0 : index
      %23 = vector.load %arg9[%c0_21, %c0_22] : memref<2x768xf32, #tpu.memory_space<vmem>>, vector<2x768xf32>
      tpu.vector_store %arg9[%c0_21, %c0_22], %22 {strides = array<i32>} : memref<2x768xf32, #tpu.memory_space<vmem>>, vector<2x768xf32>,
    } else {
    }
    %c0 = arith.constant 0 : index
    %c0_1 = arith.constant 0 : index
    %3 = vector.load %arg2[%c0, %c0_1] : memref<2x768xf32, #tpu.memory_space<vmem>>, vector<2x768xf32>
    %c0_2 = arith.constant 0 : index
    %c0_3 = arith.constant 0 : index
    %4 = vector.load %arg3[%c0_2, %c0_3] : memref<2x768xf32, #tpu.memory_space<vmem>>, vector<2x768xf32>
    %c1_i32 = arith.constant 1 : i32
    %5 = arith.cmpi eq, %arg1, %c1_i32 : i32
    %6 = arith.extui %5 : i1 to i32
    %c0_i32_4 = arith.constant 0 : i32
    %7 = arith.cmpi ne, %6, %c0_i32_4 : i32
    scf.if %7 {
      %14 = tpu.iota {dimensions = array<i32: 1>} : vector<2x768xi32>
      %c372_i32 = arith.constant 372 : i32
      %15 = vector.broadcast %c372_i32 : i32 to vector<2x768xi32>
      %16 = arith.cmpi slt, %14, %15 : vector<2x768xi32>
      %cst = arith.constant 0.000000e+00 : f32
      %17 = vector.broadcast %cst : f32 to vector<2x768xf32>
      %18 = arith.select %16, %3, %17 : vector<2x768xi1>, vector<2x768xf32>
      %cst_9 = arith.constant 0.000000e+00 : f32
      %19 = vector.broadcast %cst_9 : f32 to vector<2x768xf32>
      %20 = arith.select %16, %4, %19 : vector<2x768xi1>, vector<2x768xf32>
      %c0_10 = arith.constant 0 : index
      %c0_11 = arith.constant 0 : index
      %21 = vector.load %arg5[%c0_10, %c0_11] : memref<2x768xf32, #tpu.memory_space<vmem>>, vector<2x768xf32>
      %22 = arith.addf %21, %18 : vector<2x768xf32>
      %c0_12 = arith.constant 0 : index
      %c0_13 = arith.constant 0 : index
      %23 = vector.load %arg5[%c0_12, %c0_13] : memref<2x768xf32, #tpu.memory_space<vmem>>, vector<2x768xf32>
      tpu.vector_store %arg5[%c0_12, %c0_13], %22 {strides = array<i32>} : memref<2x768xf32, #tpu.memory_space<vmem>>, vector<2x768xf32>,
      %c0_14 = arith.constant 0 : index
      %c0_15 = arith.constant 0 : index
      %24 = vector.load %arg6[%c0_14, %c0_15] : memref<2x768xf32, #tpu.memory_space<vmem>>, vector<2x768xf32>
      %25 = arith.addf %24, %20 : vector<2x768xf32>
      %c0_16 = arith.constant 0 : index
      %c0_17 = arith.constant 0 : index
      %26 = vector.load %arg6[%c0_16, %c0_17] : memref<2x768xf32, #tpu.memory_space<vmem>>, vector<2x768xf32>
      tpu.vector_store %arg6[%c0_16, %c0_17], %25 {strides = array<i32>} : memref<2x768xf32, #tpu.memory_space<vmem>>, vector<2x768xf32>,
      %c0_18 = arith.constant 0 : index
      %c0_19 = arith.constant 0 : index
      %27 = vector.load %arg7[%c0_18, %c0_19] : memref<2x768xf32, #tpu.memory_space<vmem>>, vector<2x768xf32>
      %28 = arith.mulf %18, %20 : vector<2x768xf32>
      %29 = arith.addf %27, %28 : vector<2x768xf32>
      %c0_20 = arith.constant 0 : index
      %c0_21 = arith.constant 0 : index
      %30 = vector.load %arg7[%c0_20, %c0_21] : memref<2x768xf32, #tpu.memory_space<vmem>>, vector<2x768xf32>
      tpu.vector_store %arg7[%c0_20, %c0_21], %29 {strides = array<i32>} : memref<2x768xf32, #tpu.memory_space<vmem>>, vector<2x768xf32>,
      %c0_22 = arith.constant 0 : index
      %c0_23 = arith.constant 0 : index
      %31 = vector.load %arg8[%c0_22, %c0_23] : memref<2x768xf32, #tpu.memory_space<vmem>>, vector<2x768xf32>
      %32 = arith.mulf %18, %18 : vector<2x768xf32>
      %33 = arith.addf %31, %32 : vector<2x768xf32>
      %c0_24 = arith.constant 0 : index
      %c0_25 = arith.constant 0 : index
      %34 = vector.load %arg8[%c0_24, %c0_25] : memref<2x768xf32, #tpu.memory_space<vmem>>, vector<2x768xf32>
      tpu.vector_store %arg8[%c0_24, %c0_25], %33 {strides = array<i32>} : memref<2x768xf32, #tpu.memory_space<vmem>>, vector<2x768xf32>,
      %c0_26 = arith.constant 0 : index
      %c0_27 = arith.constant 0 : index
      %35 = vector.load %arg9[%c0_26, %c0_27] : memref<2x768xf32, #tpu.memory_space<vmem>>, vector<2x768xf32>
      %36 = arith.mulf %20, %20 : vector<2x768xf32>
      %37 = arith.addf %35, %36 : vector<2x768xf32>
      %c0_28 = arith.constant 0 : index
      %c0_29 = arith.constant 0 : index
      %38 = vector.load %arg9[%c0_28, %c0_29] : memref<2x768xf32, #tpu.memory_space<vmem>>, vector<2x768xf32>
      tpu.vector_store %arg9[%c0_28, %c0_29], %37 {strides = array<i32>} : memref<2x768xf32, #tpu.memory_space<vmem>>, vector<2x768xf32>,
    } else {
    }
    %c1_i32_5 = arith.constant 1 : i32
    %8 = arith.cmpi ne, %arg1, %c1_i32_5 : i32
    %9 = arith.extui %8 : i1 to i32
    %c0_i32_6 = arith.constant 0 : i32
    %10 = arith.cmpi ne, %9, %c0_i32_6 : i32
    scf.if %10 {
      %c0_9 = arith.constant 0 : index
      %c0_10 = arith.constant 0 : index
      %14 = vector.load %arg5[%c0_9, %c0_10] : memref<2x768xf32, #tpu.memory_space<vmem>>, vector<2x768xf32>
      %15 = arith.addf %14, %3 : vector<2x768xf32>
      %c0_11 = arith.constant 0 : index
      %c0_12 = arith.constant 0 : index
      %16 = vector.load %arg5[%c0_11, %c0_12] : memref<2x768xf32, #tpu.memory_space<vmem>>, vector<2x768xf32>
      tpu.vector_store %arg5[%c0_11, %c0_12], %15 {strides = array<i32>} : memref<2x768xf32, #tpu.memory_space<vmem>>, vector<2x768xf32>,
      %c0_13 = arith.constant 0 : index
      %c0_14 = arith.constant 0 : index
      %17 = vector.load %arg6[%c0_13, %c0_14] : memref<2x768xf32, #tpu.memory_space<vmem>>, vector<2x768xf32>
      %18 = arith.addf %17, %4 : vector<2x768xf32>
      %c0_15 = arith.constant 0 : index
      %c0_16 = arith.constant 0 : index
      %19 = vector.load %arg6[%c0_15, %c0_16] : memref<2x768xf32, #tpu.memory_space<vmem>>, vector<2x768xf32>
      tpu.vector_store %arg6[%c0_15, %c0_16], %18 {strides = array<i32>} : memref<2x768xf32, #tpu.memory_space<vmem>>, vector<2x768xf32>,
      %c0_17 = arith.constant 0 : index
      %c0_18 = arith.constant 0 : index
      %20 = vector.load %arg7[%c0_17, %c0_18] : memref<2x768xf32, #tpu.memory_space<vmem>>, vector<2x768xf32>
      %21 = arith.mulf %3, %4 : vector<2x768xf32>
      %22 = arith.addf %20, %21 : vector<2x768xf32>
      %c0_19 = arith.constant 0 : index
      %c0_20 = arith.constant 0 : index
      %23 = vector.load %arg7[%c0_19, %c0_20] : memref<2x768xf32, #tpu.memory_space<vmem>>, vector<2x768xf32>
      tpu.vector_store %arg7[%c0_19, %c0_20], %22 {strides = array<i32>} : memref<2x768xf32, #tpu.memory_space<vmem>>, vector<2x768xf32>,
      %c0_21 = arith.constant 0 : index
      %c0_22 = arith.constant 0 : index
      %24 = vector.load %arg8[%c0_21, %c0_22] : memref<2x768xf32, #tpu.memory_space<vmem>>, vector<2x768xf32>
      %25 = arith.mulf %3, %3 : vector<2x768xf32>
      %26 = arith.addf %24, %25 : vector<2x768xf32>
      %c0_23 = arith.constant 0 : index
      %c0_24 = arith.constant 0 : index
      %27 = vector.load %arg8[%c0_23, %c0_24] : memref<2x768xf32, #tpu.memory_space<vmem>>, vector<2x768xf32>
      tpu.vector_store %arg8[%c0_23, %c0_24], %26 {strides = array<i32>} : memref<2x768xf32, #tpu.memory_space<vmem>>, vector<2x768xf32>,
      %c0_25 = arith.constant 0 : index
      %c0_26 = arith.constant 0 : index
      %28 = vector.load %arg9[%c0_25, %c0_26] : memref<2x768xf32, #tpu.memory_space<vmem>>, vector<2x768xf32>
      %29 = arith.mulf %4, %4 : vector<2x768xf32>
      %30 = arith.addf %28, %29 : vector<2x768xf32>
      %c0_27 = arith.constant 0 : index
      %c0_28 = arith.constant 0 : index
      %31 = vector.load %arg9[%c0_27, %c0_28] : memref<2x768xf32, #tpu.memory_space<vmem>>, vector<2x768xf32>
      tpu.vector_store %arg9[%c0_27, %c0_28], %30 {strides = array<i32>} : memref<2x768xf32, #tpu.memory_space<vmem>>, vector<2x768xf32>,
    } else {
    }
    %c1_i32_7 = arith.constant 1 : i32
    %11 = arith.cmpi eq, %arg1, %c1_i32_7 : i32
    %12 = arith.extui %11 : i1 to i32
    %c0_i32_8 = arith.constant 0 : i32
    %13 = arith.cmpi ne, %12, %c0_i32_8 : i32
    scf.if %13 {
      %c0_9 = arith.constant 0 : index
      %c0_10 = arith.constant 0 : index
      %14 = vector.load %arg5[%c0_9, %c0_10] : memref<2x768xf32, #tpu.memory_space<vmem>>, vector<2x384xf32>
      %c0_11 = arith.constant 0 : index
      %c384 = arith.constant 384 : index
      %15 = vector.load %arg5[%c0_11, %c384] : memref<2x768xf32, #tpu.memory_space<vmem>>, vector<2x384xf32>
      %16 = arith.addf %14, %15 : vector<2x384xf32>
      %c0_12 = arith.constant 0 : index
      %c0_13 = arith.constant 0 : index
      %17 = vector.load %arg5[%c0_12, %c0_13] : memref<2x768xf32, #tpu.memory_space<vmem>>, vector<2x384xf32>
      tpu.vector_store %arg5[%c0_12, %c0_13], %16 {strides = array<i32>} : memref<2x768xf32, #tpu.memory_space<vmem>>, vector<2x384xf32>,
      %c0_14 = arith.constant 0 : index
      %c0_15 = arith.constant 0 : index
      %18 = vector.load %arg5[%c0_14, %c0_15] : memref<2x768xf32, #tpu.memory_space<vmem>>, vector<2x384xf32>
      %c0_16 = arith.constant 0 : index
      %c0_17 = arith.constant 0 : index
      %19 = vector.load %arg4[%c0_16, %c0_17] : memref<2x1920xf32, #tpu.memory_space<vmem>>, vector<2x384xf32>
      tpu.vector_store %arg4[%c0_16, %c0_17], %18 {strides = array<i32>} : memref<2x1920xf32, #tpu.memory_space<vmem>>, vector<2x384xf32>,
      %c0_18 = arith.constant 0 : index
      %c0_19 = arith.constant 0 : index
      %20 = vector.load %arg6[%c0_18, %c0_19] : memref<2x768xf32, #tpu.memory_space<vmem>>, vector<2x384xf32>
      %c0_20 = arith.constant 0 : index
      %c384_21 = arith.constant 384 : index
      %21 = vector.load %arg6[%c0_20, %c384_21] : memref<2x768xf32, #tpu.memory_space<vmem>>, vector<2x384xf32>
      %22 = arith.addf %20, %21 : vector<2x384xf32>
      %c0_22 = arith.constant 0 : index
      %c0_23 = arith.constant 0 : index
      %23 = vector.load %arg6[%c0_22, %c0_23] : memref<2x768xf32, #tpu.memory_space<vmem>>, vector<2x384xf32>
      tpu.vector_store %arg6[%c0_22, %c0_23], %22 {strides = array<i32>} : memref<2x768xf32, #tpu.memory_space<vmem>>, vector<2x384xf32>,
      %c0_24 = arith.constant 0 : index
      %c0_25 = arith.constant 0 : index
      %24 = vector.load %arg6[%c0_24, %c0_25] : memref<2x768xf32, #tpu.memory_space<vmem>>, vector<2x384xf32>
      %c0_26 = arith.constant 0 : index
      %c384_27 = arith.constant 384 : index
      %25 = vector.load %arg4[%c0_26, %c384_27] : memref<2x1920xf32, #tpu.memory_space<vmem>>, vector<2x384xf32>
      tpu.vector_store %arg4[%c0_26, %c384_27], %24 {strides = array<i32>} : memref<2x1920xf32, #tpu.memory_space<vmem>>, vector<2x384xf32>,
      %c0_28 = arith.constant 0 : index
      %c0_29 = arith.constant 0 : index
      %26 = vector.load %arg7[%c0_28, %c0_29] : memref<2x768xf32, #tpu.memory_space<vmem>>, vector<2x384xf32>
      %c0_30 = arith.constant 0 : index
      %c384_31 = arith.constant 384 : index
      %27 = vector.load %arg7[%c0_30, %c384_31] : memref<2x768xf32, #tpu.memory_space<vmem>>, vector<2x384xf32>
      %28 = arith.addf %26, %27 : vector<2x384xf32>
      %c0_32 = arith.constant 0 : index
      %c0_33 = arith.constant 0 : index
      %29 = vector.load %arg7[%c0_32, %c0_33] : memref<2x768xf32, #tpu.memory_space<vmem>>, vector<2x384xf32>
      tpu.vector_store %arg7[%c0_32, %c0_33], %28 {strides = array<i32>} : memref<2x768xf32, #tpu.memory_space<vmem>>, vector<2x384xf32>,
      %c0_34 = arith.constant 0 : index
      %c0_35 = arith.constant 0 : index
      %30 = vector.load %arg7[%c0_34, %c0_35] : memref<2x768xf32, #tpu.memory_space<vmem>>, vector<2x384xf32>
      %c0_36 = arith.constant 0 : index
      %c768 = arith.constant 768 : index
      %31 = vector.load %arg4[%c0_36, %c768] : memref<2x1920xf32, #tpu.memory_space<vmem>>, vector<2x384xf32>
      tpu.vector_store %arg4[%c0_36, %c768], %30 {strides = array<i32>} : memref<2x1920xf32, #tpu.memory_space<vmem>>, vector<2x384xf32>,
      %c0_37 = arith.constant 0 : index
      %c0_38 = arith.constant 0 : index
      %32 = vector.load %arg8[%c0_37, %c0_38] : memref<2x768xf32, #tpu.memory_space<vmem>>, vector<2x384xf32>
      %c0_39 = arith.constant 0 : index
      %c384_40 = arith.constant 384 : index
      %33 = vector.load %arg8[%c0_39, %c384_40] : memref<2x768xf32, #tpu.memory_space<vmem>>, vector<2x384xf32>
      %34 = arith.addf %32, %33 : vector<2x384xf32>
      %c0_41 = arith.constant 0 : index
      %c0_42 = arith.constant 0 : index
      %35 = vector.load %arg8[%c0_41, %c0_42] : memref<2x768xf32, #tpu.memory_space<vmem>>, vector<2x384xf32>
      tpu.vector_store %arg8[%c0_41, %c0_42], %34 {strides = array<i32>} : memref<2x768xf32, #tpu.memory_space<vmem>>, vector<2x384xf32>,
      %c0_43 = arith.constant 0 : index
      %c0_44 = arith.constant 0 : index
      %36 = vector.load %arg8[%c0_43, %c0_44] : memref<2x768xf32, #tpu.memory_space<vmem>>, vector<2x384xf32>
      %c0_45 = arith.constant 0 : index
      %c1152 = arith.constant 1152 : index
      %37 = vector.load %arg4[%c0_45, %c1152] : memref<2x1920xf32, #tpu.memory_space<vmem>>, vector<2x384xf32>
      tpu.vector_store %arg4[%c0_45, %c1152], %36 {strides = array<i32>} : memref<2x1920xf32, #tpu.memory_space<vmem>>, vector<2x384xf32>,
      %c0_46 = arith.constant 0 : index
      %c0_47 = arith.constant 0 : index
      %38 = vector.load %arg9[%c0_46, %c0_47] : memref<2x768xf32, #tpu.memory_space<vmem>>, vector<2x384xf32>
      %c0_48 = arith.constant 0 : index
      %c384_49 = arith.constant 384 : index
      %39 = vector.load %arg9[%c0_48, %c384_49] : memref<2x768xf32, #tpu.memory_space<vmem>>, vector<2x384xf32>
      %40 = arith.addf %38, %39 : vector<2x384xf32>
      %c0_50 = arith.constant 0 : index
      %c0_51 = arith.constant 0 : index
      %41 = vector.load %arg9[%c0_50, %c0_51] : memref<2x768xf32, #tpu.memory_space<vmem>>, vector<2x384xf32>
      tpu.vector_store %arg9[%c0_50, %c0_51], %40 {strides = array<i32>} : memref<2x768xf32, #tpu.memory_space<vmem>>, vector<2x384xf32>,
      %c0_52 = arith.constant 0 : index
      %c0_53 = arith.constant 0 : index
      %42 = vector.load %arg9[%c0_52, %c0_53] : memref<2x768xf32, #tpu.memory_space<vmem>>, vector<2x384xf32>
      %c0_54 = arith.constant 0 : index
      %c1536 = arith.constant 1536 : index
      %43 = vector.load %arg4[%c0_54, %c1536] : memref<2x1920xf32, #tpu.memory_space<vmem>>, vector<2x384xf32>
      tpu.vector_store %arg4[%c0_54, %c1536], %42 {strides = array<i32>} : memref<2x1920xf32, #tpu.memory_space<vmem>>, vector<2x384xf32>,
    } else {
    }
    return
  }
  func.func @transform_0(%arg0: i32, %arg1: i32) -> (i32, i32) {
    %c0_i32 = arith.constant 0 : i32
    return %arg0, %arg1 : i32, i32
  }
  func.func @transform_1(%arg0: i32, %arg1: i32) -> (i32, i32) {
    %c0_i32 = arith.constant 0 : i32
    return %arg0, %arg1 : i32, i32
  }
  func.func @transform_2(%arg0: i32, %arg1: i32) -> (i32, i32) {
    %c0_i32 = arith.constant 0 : i32
    %c0_i32_0 = arith.constant 0 : i32
    return %arg0, %c0_i32 : i32, i32
  }
}

</mosaic_0001>

<llo_original>
// kernel: tpu_custom_call.1
$region0: #{tpu_custom_call.1}
  #allocation0 [shape = 'u32[]', space=smem, size = 0x4, offset = 0x4, fixed_abs, tag = 'smem constant byte address 0x4 - core index']
  #allocation1 [shape = 'u32[144,128]{1,0:T(1,128)}', space=vmem, size = 0x12000, scoped, tag = 'internal scratch']
  #allocation2 [shape = 'f32[2,768]{1,0:T(2,128)}', space=vmem, size = 0x1800, scoped, tag = 'scratch operand']
  #allocation3 [shape = 'f32[2,768]{1,0:T(2,128)}', space=vmem, size = 0x1800, scoped, tag = 'scratch operand']
  #allocation4 [shape = 'f32[2,768]{1,0:T(2,128)}', space=vmem, size = 0x1800, scoped, tag = 'scratch operand']
  #allocation5 [shape = 'f32[2,768]{1,0:T(2,128)}', space=vmem, size = 0x1800, scoped, tag = 'scratch operand']
  #allocation6 [shape = 'f32[2,768]{1,0:T(2,128)}', space=vmem, size = 0x1800, scoped, tag = 'scratch operand']
  %s0 = inlined_call_operand.hbm [shape: f32[2,1140], index: 0, kind: input, shape index: {}]
  %s1 = inlined_call_operand.hbm [shape: f32[2,1140], index: 1, kind: input, shape index: {}]
  %s2 = inlined_call_operand.hbm [shape: f32[2,1920], index: 2, kind: output, shape index: {}]
  %s3 = sld [smem:[#allocation0]]
  $region65: #{tpu_custom_call.1} parent=0
    _
  %s5 = ssub.s32 1, %s3
  %s6 = scalar_select 0, %s5, %s3
  $region1: #{tpu_custom_call.1} parent=0
    #allocation7 [shape = 'u8[12288]{0}', space=vmem, size = 0x3000, scoped, tag = 'input window, operand 0']
    #allocation8 [shape = 's32[2]{0}', space=sflag, size = 0x8, scoped, tag = 'scoped memory for tpu_custom_call.1']
    #allocation9 [shape = 's32[2]{0}', space=sflag, size = 0x8, scoped, tag = 'scoped memory for tpu_custom_call.1']
    #allocation10 [shape = 'u8[12288]{0}', space=vmem, size = 0x3000, scoped, tag = 'input window, operand 1']
    #allocation11 [shape = 's32[2]{0}', space=sflag, size = 0x8, scoped, tag = 'scoped memory for tpu_custom_call.1']
    #allocation12 [shape = 'u8[15360]{0}', space=vmem, size = 0x3c00, scoped, tag = 'output window, operand 0, single buffered']
    %7 = vsyncpa [#allocation8], 0
    %s8 = scalar_lea.sflag [#allocation8], 1
    %9 = vsyncpa %s8, 0
    %10 = vsyncpa [#allocation11], 0
    %s11 = scalar_lea.sflag [#allocation11], 1
    %12 = vsyncpa %s11, 0
    %13 = vsyncpa [#allocation9], 0
    loop: start=0, step=1, limit=4
    $region2: #{tpu_custom_call.1} parent=1 // loop_pre_header
      _
    $region3: #{tpu_custom_call.1} parent=1 // loop_header
      %s15 = sphi 0, %s19
      %p16 = scmp.ge.s32.totalorder %s15, 4
      %s22 = sphi 0, %s34
      %s23 = sphi 0, %s30
      %s24 = sphi 0, %s22
      %s25 = sphi 0, %s23
      %s26 = sphi 0, %s24
      %s27 = sphi 0, %s25
      %s39 = sphi 0, %s41
      %s42 = sphi 0, %s39
      %s43 = sphi 0, %s42
      %s59 = sphi 0, %s43
      %s67 = sphi 0, %s69
      %s70 = sphi 0, %s67
      %s71 = sphi 0, %s70
      %s87 = sphi 0, %s71
      %s93 = sphi 0, %s95
      %s96 = sphi 0, %s93
      %s97 = sphi 0, %s96
      %s113 = sphi 0, %s97
    $region4: #{tpu_custom_call.1} parent=1 // loop_header_branch
      %18 = sbr.rel (%p16) target = $region8
    $region5: #{tpu_custom_call.1} parent=1 // loop_body
      %s20 = ssub.s32 %s15, 1
      %s21 = ssub.s32 %s15, 2
      %s28 = sadd.s32 1, %s23
      %p29 = scmp.ge.s32.totalorder %s28, 2
      %s30 = scalar_select %p29, 0, %s28
      %s31 = sadd.s32 1, %s22
      %s32 = scalar_select %p29, %s31, %s22
      %p33 = scmp.ge.s32.totalorder %s32, 1
      %s34 = scalar_select %p33, 0, %s32
      %s35 = ssub.s32 %s22, %s34
      %s36 = ssub.s32 %s23, %s30
      %s37 = sor.u32 %s35, %s36
      %p38 = scmp.eq.s32.totalorder %s37, 0
      %s40 = sadd.s32 %s39, 1
      %s41 = scalar_select %p38, %s39, %s40
      %p44 = pneg %p38
      %p45 = scmp.eq.s32.totalorder %s15, 1
      %p46 = por %p44, %p45
      %p47 = scmp.ne.s32.totalorder %s39, %s42
      %p48 = scmp.eq.s32.totalorder %s15, 0
      %p49 = por %p47, %p48
      %p50 = scmp.ne.s32.totalorder %s39, %s42
      %p51 = scmp.eq.s32.totalorder %s20, 1
      %p52 = por %p50, %p51
      %p53 = scmp.ne.s32.totalorder %s42, %s43
      %p54 = scmp.eq.s32.totalorder %s20, 0
      %p55 = por %p53, %p54
      %p56 = scmp.ne.s32.totalorder %s42, %s43
      %p57 = scmp.eq.s32.totalorder %s21, 1
      %p58 = por %p56, %p57
      %p60 = scmp.ne.s32.totalorder %s43, %s59
      %p61 = scmp.eq.s32.totalorder %s21, 0
      %p62 = por %p60, %p61
      %s63 = ssub.s32 %s22, %s34
      %s64 = ssub.s32 %s23, %s30
      %s65 = sor.u32 %s63, %s64
      %p66 = scmp.eq.s32.totalorder %s65, 0
      %s68 = sadd.s32 %s67, 1
      %s69 = scalar_select %p66, %s67, %s68
      %p72 = pneg %p66
      %p73 = scmp.eq.s32.totalorder %s15, 1
      %p74 = por %p72, %p73
      %p75 = scmp.ne.s32.totalorder %s67, %s70
      %p76 = scmp.eq.s32.totalorder %s15, 0
      %p77 = por %p75, %p76
      %p78 = scmp.ne.s32.totalorder %s67, %s70
      %p79 = scmp.eq.s32.totalorder %s20, 1
      %p80 = por %p78, %p79
      %p81 = scmp.ne.s32.totalorder %s70, %s71
      %p82 = scmp.eq.s32.totalorder %s20, 0
      %p83 = por %p81, %p82
      %p84 = scmp.ne.s32.totalorder %s70, %s71
      %p85 = scmp.eq.s32.totalorder %s21, 1
      %p86 = por %p84, %p85
      %p88 = scmp.ne.s32.totalorder %s71, %s87
      %p89 = scmp.eq.s32.totalorder %s21, 0
      %p90 = por %p88, %p89
      %s91 = ssub.s32 %s22, %s34
      %p92 = scmp.eq.s32.totalorder %s91, 0
      %s94 = sadd.s32 %s93, 1
      %s95 = scalar_select %p92, %s93, %s94
      %p98 = pneg %p92
      %p99 = scmp.eq.s32.totalorder %s15, 1
      %p100 = por %p98, %p99
      %p101 = scmp.ne.s32.totalorder %s93, %s96
      %p102 = scmp.eq.s32.totalorder %s15, 0
      %p103 = por %p101, %p102
      %p104 = scmp.ne.s32.totalorder %s93, %s96
      %p105 = scmp.eq.s32.totalorder %s20, 1
      %p106 = por %p104, %p105
      %p107 = scmp.ne.s32.totalorder %s96, %s97
      %p108 = scmp.eq.s32.totalorder %s20, 0
      %p109 = por %p107, %p108
      %p110 = scmp.ne.s32.totalorder %s96, %s97
      %p111 = scmp.eq.s32.totalorder %s21, 1
      %p112 = por %p110, %p111
      %p114 = scmp.ne.s32.totalorder %s97, %s113
      %p115 = scmp.eq.s32.totalorder %s21, 0
      %p116 = por %p114, %p115
      %p117 = scmp.le.s32.totalorder 1, %s15
      %p118 = scmp.lt.s32.totalorder %s15, 3
      %p119 = pnand %p117, %p118
      %p120 = pneg %p119
      // Predicated region
      $region9: #{tpu_custom_call.1} parent=5 // pred_check
        _
      $region10: #{tpu_custom_call.1} parent=5 // pred_check_branch
        %122 = sbr.rel (%p119) target = $region12
      $region11: #{tpu_custom_call.1} parent=5 // pred_region
        %s123 = ssub.s32 %s15, 1
      $region12: #{tpu_custom_call.1} parent=5 // pred_fallthru
        _
      %p124 = scmp.lt.s32.totalorder %s15, 2
      // Predicated region
      $region13: #{tpu_custom_call.1} parent=5 // pred_check
        %p125 = pneg %p124
      $region14: #{tpu_custom_call.1} parent=5 // pred_check_branch
        %127 = sbr.rel (%p125) target = $region16
      $region15: #{tpu_custom_call.1} parent=5 // pred_region
        // Predicated region
        $region17: #{tpu_custom_call.1} parent=15 // pred_check
          %p128 = pneg %p49
        $region18: #{tpu_custom_call.1} parent=15 // pred_check_branch
          %130 = sbr.rel (%p128) target = $region20
        $region19: #{tpu_custom_call.1} parent=15 // pred_region
          %s131 = sand.u32 %s39, 1
          %s132 = scalar_lea.sflag [#allocation8], %s131
          %s133 = sand.u32 %s39, 1
          %s134 = smul.addr %s133, 12
          %s135 = scalar_lea.vmem [#allocation7], %s134
          %s136 = smul.u32 6, %s23
          %s137 = ssub.s32 9, %s136
          %p138 = scmp.lt.s32.totalorder %s137, 6
          %s139 = scalar_select %p138, %s137, 6
          %s140 = smul.u32 32, %s139
          %s142 = ssub.s32 192, %s140
          %143 = vsyncadd %s132, %s142
          %p144 = scmp.ne.s32.totalorder 0, %s140
          %s145 = smul.addr %s22, 9
          %s146 = sadd.s32 %s136, %s145
          %s147 = smul.addr %s146, 32
          %s148 = scalar_lea.hbm %s0, %s147
          %s149 = smul.u32 %s139, 2
          %s150 = sshll.u32 %s149, 4
          %s151 = sshll.u32 %s135, 4
          %s152 = int_to_ptr.vmem [resolvable:$true] %s151
          %154 = dma.hbm_to_vmem [thread:$0]  (%p144), %s148, %s150, %s152, %s132
        $region20: #{tpu_custom_call.1} parent=15 // pred_fallthru
          _
        // Predicated region
        $region21: #{tpu_custom_call.1} parent=15 // pred_check
          %p155 = pneg %p77
        $region22: #{tpu_custom_call.1} parent=15 // pred_check_branch
          %157 = sbr.rel (%p155) target = $region24
        $region23: #{tpu_custom_call.1} parent=15 // pred_region
          %s158 = sand.u32 %s67, 1
          %s159 = scalar_lea.sflag [#allocation11], %s158
          %s160 = sand.u32 %s67, 1
          %s161 = smul.addr %s160, 12
          %s162 = scalar_lea.vmem [#allocation10], %s161
          %s163 = smul.u32 6, %s23
          %s164 = ssub.s32 9, %s163
          %p165 = scmp.lt.s32.totalorder %s164, 6
          %s166 = scalar_select %p165, %s164, 6
          %s167 = smul.u32 32, %s166
          %s169 = ssub.s32 192, %s167
          %170 = vsyncadd %s159, %s169
          %p171 = scmp.ne.s32.totalorder 0, %s167
          %s172 = smul.addr %s22, 9
          %s173 = sadd.s32 %s163, %s172
          %s174 = smul.addr %s173, 32
          %s175 = scalar_lea.hbm %s1, %s174
          %s176 = smul.u32 %s166, 2
          %s177 = sshll.u32 %s176, 4
          %s178 = sshll.u32 %s162, 4
          %s179 = int_to_ptr.vmem [resolvable:$true] %s178
          %181 = dma.hbm_to_vmem [thread:$0]  (%p171), %s175, %s177, %s179, %s159
        $region24: #{tpu_custom_call.1} parent=15 // pred_fallthru
          _
      $region16: #{tpu_custom_call.1} parent=5 // pred_fallthru
        _
      %p182 = scmp.le.s32.totalorder 1, %s15
      %p183 = scmp.lt.s32.totalorder %s15, 3
      %p184 = pnand %p182, %p183
      %p185 = pneg %p184
      // Predicated region
      $region25: #{tpu_custom_call.1} parent=5 // pred_check
        _
      $region26: #{tpu_custom_call.1} parent=5 // pred_check_branch
        %187 = sbr.rel (%p184) target = $region28
      $region27: #{tpu_custom_call.1} parent=5 // pred_region
        %s188 = ssub.s32 %s15, 1
        %s189 = sand.u32 %s42, 1
        %s190 = scalar_lea.sflag [#allocation8], %s189
        %s191 = sand.u32 %s42, 1
        %s192 = smul.addr %s191, 12
        %s193 = scalar_lea.vmem [#allocation7], %s192
        // Predicated region
        $region29: #{tpu_custom_call.1} parent=27 // pred_check
          %p194 = pneg %p55
        $region30: #{tpu_custom_call.1} parent=27 // pred_check_branch
          %196 = sbr.rel (%p194) target = $region32
        $region31: #{tpu_custom_call.1} parent=27 // pred_region
          %197 = dma.done %s190, 192
        $region32: #{tpu_custom_call.1} parent=27 // pred_fallthru
          _
        %s198 = sand.u32 %s70, 1
        %s199 = scalar_lea.sflag [#allocation11], %s198
        %s200 = sand.u32 %s70, 1
        %s201 = smul.addr %s200, 12
        %s202 = scalar_lea.vmem [#allocation10], %s201
        // Predicated region
        $region33: #{tpu_custom_call.1} parent=27 // pred_check
          %p203 = pneg %p83
        $region34: #{tpu_custom_call.1} parent=27 // pred_check_branch
          %205 = sbr.rel (%p203) target = $region36
        $region35: #{tpu_custom_call.1} parent=27 // pred_region
          %206 = dma.done %s199, 192
        $region36: #{tpu_custom_call.1} parent=27 // pred_fallthru
          _
        %s207 = sand.u32 %s42, 1
        %s208 = scalar_lea.sflag [#allocation8], %s207
        %s209 = sand.u32 %s42, 1
        %s210 = smul.addr %s209, 12
        %s211 = scalar_lea.vmem [#allocation7], %s210
        %p212 = pneg %p55
        %p213 = pneg %p52
        %s214 = sand.u32 %s70, 1
        %s215 = scalar_lea.sflag [#allocation11], %s214
        %s216 = sand.u32 %s70, 1
        %s217 = smul.addr %s216, 12
        %s218 = scalar_lea.vmem [#allocation10], %s217
        %p219 = pneg %p83
        %p220 = pneg %p80
        %p221 = pneg %p109
        %p222 = pneg %p106
        %s223 = smul.u32 6, %s25
        %s224 = ssub.s32 9, %s223
        %p225 = scmp.lt.s32.totalorder %s224, 6
        %s226 = scalar_select %p225, %s224, 6
        %s227 = smul.u32 32, %s226
        %s228 = smul.u32 6, %s25
        %s229 = ssub.s32 9, %s228
        %p230 = scmp.lt.s32.totalorder %s229, 6
        %s231 = scalar_select %p230, %s229, 6
        %s232 = smul.u32 32, %s231
        %p233 = scmp.eq.s32.totalorder %s25, 0
        // Predicated region
        $region37: #{tpu_custom_call.1} parent=27 // pred_check
          %p234 = pneg %p233
        $region38: #{tpu_custom_call.1} parent=27 // pred_check_branch
          %236 = sbr.rel (%p234) target = $region40
        $region39: #{tpu_custom_call.1} parent=27 // pred_region
          %237 = vst [vmem:[#allocation2] sm:$0xff] 0.0
          %238 = vst [vmem:[#allocation2 + $0x8] sm:$0xf] 0.0
          %239 = vst [vmem:[#allocation3] sm:$0xff] 0.0
          %240 = vst [vmem:[#allocation3 + $0x8] sm:$0xf] 0.0
          %241 = vst [vmem:[#allocation4] sm:$0xff] 0.0
          %242 = vst [vmem:[#allocation4 + $0x8] sm:$0xf] 0.0
          %243 = vst [vmem:[#allocation5] sm:$0xff] 0.0
          %244 = vst [vmem:[#allocation5 + $0x8] sm:$0xf] 0.0
          %245 = vst [vmem:[#allocation6] sm:$0xff] 0.0
          %246 = vst [vmem:[#allocation6 + $0x8] sm:$0xf] 0.0
        $region40: #{tpu_custom_call.1} parent=27 // pred_fallthru
          _
        %v247 = vld [vmem:[%s193] sm:$0xff]
        %v248 = vld [vmem:[%s193 + $0x8] sm:$0xf]
        %v249 = vld [vmem:[%s202] sm:$0xff]
        %v250 = vld [vmem:[%s202 + $0x8] sm:$0xf]
        %p251 = scmp.eq.s32.totalorder %s25, 1
        // Predicated region
        $region41: #{tpu_custom_call.1} parent=27 // pred_check
          %p252 = pneg %p251
        $region42: #{tpu_custom_call.1} parent=27 // pred_check_branch
          %254 = sbr.rel (%p252) target = $region44
        $region43: #{tpu_custom_call.1} parent=27 // pred_region
          %v255 = vlaneseq
          %v256 = vand.u32 %v255, 127
          %v257 = vadd.s32 %v256, 128
          %v258 = vadd.s32 %v256, 256
          %v259 = vadd.s32 %v256, 384
          %v260 = vadd.s32 %v256, 512
          %v261 = vadd.s32 %v256, 640
          %vm262 = vcmp.lt.s32.totalorder %v256, 372
          %vm263 = vcmp.lt.s32.totalorder %v257, 372
          %vm264 = vcmp.lt.s32.totalorder %v258, 372
          %vm265 = vcmp.lt.s32.totalorder %v259, 372
          %vm266 = vcmp.lt.s32.totalorder %v260, 372
          %vm267 = vcmp.lt.s32.totalorder %v261, 372
          %v270 = vcombine.high %v247, %v247
          %v272 = vunpack.c.l.s4 1983009808
          %v273 = vunpack.c.0.s8 %v272
          %v274 = vlaneseq
          %v275 = vshrl.u32 %v274, 7
          %v276 = vsub.s32 %v273, %v275
          %v277 = vrot.slane %v247, %v276
          %v279 = vunpack.c.l.s4 1983009808
          %v280 = vunpack.c.0.s8 %v279
          %v281 = vlaneseq
          %v282 = vshrl.u32 %v281, 7
          %v283 = vsub.s32 %v280, %v282
          %v284 = vrot.slane %v270, %v283
          %v285 = vcombine.high %v277, %v277
          %v286 = vcombine.high %v284, %v284
          %v288 = vunpack.c.l.s4 1983009808
          %v289 = vunpack.c.0.s8 %v288
          %v290 = vlaneseq
          %v291 = vshrl.u32 %v290, 7
          %v292 = vsub.s32 %v289, %v291
          %v293 = vrot.slane %v248, %v292
          %v294 = vcombine.high %v293, %v293
          %v301 = vsel %vm262, %v277, 0.0
          %v302 = vsel %vm263, %v285, 0.0
          %v303 = vsel %vm264, %v284, 0.0
          %v304 = vsel %vm265, %v286, 0.0
          %v305 = vsel %vm266, %v293, 0.0
          %v306 = vsel %vm267, %v294, 0.0
          %v309 = vcombine.high %v249, %v249
          %v311 = vunpack.c.l.s4 1983009808
          %v312 = vunpack.c.0.s8 %v311
          %v313 = vlaneseq
          %v314 = vshrl.u32 %v313, 7
          %v315 = vsub.s32 %v312, %v314
          %v316 = vrot.slane %v249, %v315
          %v318 = vunpack.c.l.s4 1983009808
          %v319 = vunpack.c.0.s8 %v318
          %v320 = vlaneseq
          %v321 = vshrl.u32 %v320, 7
          %v322 = vsub.s32 %v319, %v321
          %v323 = vrot.slane %v309, %v322
          %v324 = vcombine.high %v316, %v316
          %v325 = vcombine.high %v323, %v323
          %v327 = vunpack.c.l.s4 1983009808
          %v328 = vunpack.c.0.s8 %v327
          %v329 = vlaneseq
          %v330 = vshrl.u32 %v329, 7
          %v331 = vsub.s32 %v328, %v330
          %v332 = vrot.slane %v250, %v331
          %v333 = vcombine.high %v332, %v332
          %v340 = vsel %vm262, %v316, 0.0
          %v341 = vsel %vm263, %v324, 0.0
          %v342 = vsel %vm264, %v323, 0.0
          %v343 = vsel %vm265, %v325, 0.0
          %v344 = vsel %vm266, %v332, 0.0
          %v345 = vsel %vm267, %v333, 0.0
          %v346 = vld [vmem:[#allocation2] sm:$0xff]
          %v347 = vld [vmem:[#allocation2 + $0x8] sm:$0xf]
          %v354 = vcombine.low %v301, %v302
          %v355 = vcombine.low %v303, %v304
          %v357 = vunpack.c.l.s4 1983009808
          %v358 = vunpack.c.0.s8 %v357
          %v359 = vlaneseq
          %v360 = vshrl.u32 %v359, 7
          %v361 = vsub.s32 %v358, %v360
          %v362 = vrot.slane %v354, %v361
          %v364 = vunpack.c.l.s4 1983009808
          %v365 = vunpack.c.0.s8 %v364
          %v366 = vlaneseq
          %v367 = vshrl.u32 %v366, 7
          %v368 = vsub.s32 %v365, %v367
          %v369 = vrot.slane %v355, %v368
          %v370 = vcombine.low %v362, %v369
          %v371 = vcombine.low %v305, %v306
          %v373 = vunpack.c.l.s4 1983009808
          %v374 = vunpack.c.0.s8 %v373
          %v375 = vlaneseq
          %v376 = vshrl.u32 %v375, 7
          %v377 = vsub.s32 %v374, %v376
          %v378 = vrot.slane %v371, %v377
          %v381 = vadd.f32 %v346, %v370
          %v382 = vadd.f32 %v347, %v378
          %383 = vst [vmem:[#allocation2] sm:$0xff] %v381
          %384 = vst [vmem:[#allocation2 + $0x8] sm:$0xf] %v382
          %v385 = vld [vmem:[#allocation3] sm:$0xff]
          %v386 = vld [vmem:[#allocation3 + $0x8] sm:$0xf]
          %v393 = vcombine.low %v340, %v341
          %v394 = vcombine.low %v342, %v343
          %v396 = vunpack.c.l.s4 1983009808
          %v397 = vunpack.c.0.s8 %v396
          %v398 = vlaneseq
          %v399 = vshrl.u32 %v398, 7
          %v400 = vsub.s32 %v397, %v399
          %v401 = vrot.slane %v393, %v400
          %v403 = vunpack.c.l.s4 1983009808
          %v404 = vunpack.c.0.s8 %v403
          %v405 = vlaneseq
          %v406 = vshrl.u32 %v405, 7
          %v407 = vsub.s32 %v404, %v406
          %v408 = vrot.slane %v394, %v407
          %v409 = vcombine.low %v401, %v408
          %v410 = vcombine.low %v344, %v345
          %v412 = vunpack.c.l.s4 1983009808
          %v413 = vunpack.c.0.s8 %v412
          %v414 = vlaneseq
          %v415 = vshrl.u32 %v414, 7
          %v416 = vsub.s32 %v413, %v415
          %v417 = vrot.slane %v410, %v416
          %v420 = vadd.f32 %v385, %v409
          %v421 = vadd.f32 %v386, %v417
          %422 = vst [vmem:[#allocation3] sm:$0xff] %v420
          %423 = vst [vmem:[#allocation3 + $0x8] sm:$0xf] %v421
          %v424 = vld [vmem:[#allocation4] sm:$0xff]
          %v425 = vld [vmem:[#allocation4 + $0x8] sm:$0xf]
          %v426 = vmul.f32 %v301, %v340
          %v427 = vmul.f32 %v302, %v341
          %v428 = vmul.f32 %v303, %v342
          %v429 = vmul.f32 %v304, %v343
          %v430 = vmul.f32 %v305, %v344
          %v431 = vmul.f32 %v306, %v345
          %v438 = vcombine.low %v426, %v427
          %v439 = vcombine.low %v428, %v429
          %v441 = vunpack.c.l.s4 1983009808
          %v442 = vunpack.c.0.s8 %v441
          %v443 = vlaneseq
          %v444 = vshrl.u32 %v443, 7
          %v445 = vsub.s32 %v442, %v444
          %v446 = vrot.slane %v438, %v445
          %v448 = vunpack.c.l.s4 1983009808
          %v449 = vunpack.c.0.s8 %v448
          %v450 = vlaneseq
          %v451 = vshrl.u32 %v450, 7
          %v452 = vsub.s32 %v449, %v451
          %v453 = vrot.slane %v439, %v452
          %v454 = vcombine.low %v446, %v453
          %v455 = vcombine.low %v430, %v431
          %v457 = vunpack.c.l.s4 1983009808
          %v458 = vunpack.c.0.s8 %v457
          %v459 = vlaneseq
          %v460 = vshrl.u32 %v459, 7
          %v461 = vsub.s32 %v458, %v460
          %v462 = vrot.slane %v455, %v461
          %v465 = vadd.f32 %v424, %v454
          %v466 = vadd.f32 %v425, %v462
          %467 = vst [vmem:[#allocation4] sm:$0xff] %v465
          %468 = vst [vmem:[#allocation4 + $0x8] sm:$0xf] %v466
          %v469 = vld [vmem:[#allocation5] sm:$0xff]
          %v470 = vld [vmem:[#allocation5 + $0x8] sm:$0xf]
          %v471 = vmul.f32 %v301, %v301
          %v472 = vmul.f32 %v302, %v302
          %v473 = vmul.f32 %v303, %v303
          %v474 = vmul.f32 %v304, %v304
          %v475 = vmul.f32 %v305, %v305
          %v476 = vmul.f32 %v306, %v306
          %v483 = vcombine.low %v471, %v472
          %v484 = vcombine.low %v473, %v474
          %v486 = vunpack.c.l.s4 1983009808
          %v487 = vunpack.c.0.s8 %v486
          %v488 = vlaneseq
          %v489 = vshrl.u32 %v488, 7
          %v490 = vsub.s32 %v487, %v489
          %v491 = vrot.slane %v483, %v490
          %v493 = vunpack.c.l.s4 1983009808
          %v494 = vunpack.c.0.s8 %v493
          %v495 = vlaneseq
          %v496 = vshrl.u32 %v495, 7
          %v497 = vsub.s32 %v494, %v496
          %v498 = vrot.slane %v484, %v497
          %v499 = vcombine.low %v491, %v498
          %v500 = vcombine.low %v475, %v476
          %v502 = vunpack.c.l.s4 1983009808
          %v503 = vunpack.c.0.s8 %v502
          %v504 = vlaneseq
          %v505 = vshrl.u32 %v504, 7
          %v506 = vsub.s32 %v503, %v505
          %v507 = vrot.slane %v500, %v506
          %v510 = vadd.f32 %v469, %v499
          %v511 = vadd.f32 %v470, %v507
          %512 = vst [vmem:[#allocation5] sm:$0xff] %v510
          %513 = vst [vmem:[#allocation5 + $0x8] sm:$0xf] %v511
          %v514 = vld [vmem:[#allocation6] sm:$0xff]
          %v515 = vld [vmem:[#allocation6 + $0x8] sm:$0xf]
          %v516 = vmul.f32 %v340, %v340
          %v517 = vmul.f32 %v341, %v341
          %v518 = vmul.f32 %v342, %v342
          %v519 = vmul.f32 %v343, %v343
          %v520 = vmul.f32 %v344, %v344
          %v521 = vmul.f32 %v345, %v345
          %v528 = vcombine.low %v516, %v517
          %v529 = vcombine.low %v518, %v519
          %v531 = vunpack.c.l.s4 1983009808
          %v532 = vunpack.c.0.s8 %v531
          %v533 = vlaneseq
          %v534 = vshrl.u32 %v533, 7
          %v535 = vsub.s32 %v532, %v534
          %v536 = vrot.slane %v528, %v535
          %v538 = vunpack.c.l.s4 1983009808
          %v539 = vunpack.c.0.s8 %v538
          %v540 = vlaneseq
          %v541 = vshrl.u32 %v540, 7
          %v542 = vsub.s32 %v539, %v541
          %v543 = vrot.slane %v529, %v542
          %v544 = vcombine.low %v536, %v543
          %v545 = vcombine.low %v520, %v521
          %v547 = vunpack.c.l.s4 1983009808
          %v548 = vunpack.c.0.s8 %v547
          %v549 = vlaneseq
          %v550 = vshrl.u32 %v549, 7
          %v551 = vsub.s32 %v548, %v550
          %v552 = vrot.slane %v545, %v551
          %v555 = vadd.f32 %v514, %v544
          %v556 = vadd.f32 %v515, %v552
          %557 = vst [vmem:[#allocation6] sm:$0xff] %v555
          %558 = vst [vmem:[#allocation6 + $0x8] sm:$0xf] %v556
        $region44: #{tpu_custom_call.1} parent=27 // pred_fallthru
          _
        %p559 = scmp.ne.s32.totalorder %s25, 1
        // Predicated region
        $region45: #{tpu_custom_call.1} parent=27 // pred_check
          %p560 = pneg %p559
        $region46: #{tpu_custom_call.1} parent=27 // pred_check_branch
          %562 = sbr.rel (%p560) target = $region48
        $region47: #{tpu_custom_call.1} parent=27 // pred_region
          %v563 = vld [vmem:[#allocation2] sm:$0xff]
          %v564 = vld [vmem:[#allocation2 + $0x8] sm:$0xf]
          %v565 = vadd.f32 %v563, %v247
          %v566 = vadd.f32 %v564, %v248
          %567 = vst [vmem:[#allocation2] sm:$0xff] %v565
          %568 = vst [vmem:[#allocation2 + $0x8] sm:$0xf] %v566
          %v569 = vld [vmem:[#allocation3] sm:$0xff]
          %v570 = vld [vmem:[#allocation3 + $0x8] sm:$0xf]
          %v571 = vadd.f32 %v569, %v249
          %v572 = vadd.f32 %v570, %v250
          %573 = vst [vmem:[#allocation3] sm:$0xff] %v571
          %574 = vst [vmem:[#allocation3 + $0x8] sm:$0xf] %v572
          %v575 = vld [vmem:[#allocation4] sm:$0xff]
          %v576 = vld [vmem:[#allocation4 + $0x8] sm:$0xf]
          %v577 = vmul.f32 %v247, %v249
          %v578 = vmul.f32 %v248, %v250
          %v579 = vadd.f32 %v575, %v577
          %v580 = vadd.f32 %v576, %v578
          %581 = vst [vmem:[#allocation4] sm:$0xff] %v579
          %582 = vst [vmem:[#allocation4 + $0x8] sm:$0xf] %v580
          %v583 = vld [vmem:[#allocation5] sm:$0xff]
          %v584 = vld [vmem:[#allocation5 + $0x8] sm:$0xf]
          %v585 = vmul.f32 %v247, %v247
          %v586 = vmul.f32 %v248, %v248
          %v587 = vadd.f32 %v583, %v585
          %v588 = vadd.f32 %v584, %v586
          %589 = vst [vmem:[#allocation5] sm:$0xff] %v587
          %590 = vst [vmem:[#allocation5 + $0x8] sm:$0xf] %v588
          %v591 = vld [vmem:[#allocation6] sm:$0xff]
          %v592 = vld [vmem:[#allocation6 + $0x8] sm:$0xf]
          %v593 = vmul.f32 %v249, %v249
          %v594 = vmul.f32 %v250, %v250
          %v595 = vadd.f32 %v591, %v593
          %v596 = vadd.f32 %v592, %v594
          %597 = vst [vmem:[#allocation6] sm:$0xff] %v595
          %598 = vst [vmem:[#allocation6 + $0x8] sm:$0xf] %v596
        $region48: #{tpu_custom_call.1} parent=27 // pred_fallthru
          _
        // Predicated region
        $region49: #{tpu_custom_call.1} parent=27 // pred_check
          %p599 = pneg %p251
        $region50: #{tpu_custom_call.1} parent=27 // pred_check_branch
          %601 = sbr.rel (%p599) target = $region52
        $region51: #{tpu_custom_call.1} parent=27 // pred_region
          %v602 = vld [vmem:[#allocation2] sm:$0x3f]
          %v603 = vld [vmem:[#allocation2 + $0x6] sm:$0x3f]
          %v604 = vadd.f32 %v602, %v603
          %605 = vst [vmem:[#allocation2] sm:$0x3f] %v604
          %v606 = vld [vmem:[#allocation2] sm:$0x3f]
          %607 = vst [vmem:[#allocation12] sm:$0x3f] %v606
          %v608 = vld [vmem:[#allocation3] sm:$0x3f]
          %v609 = vld [vmem:[#allocation3 + $0x6] sm:$0x3f]
          %v610 = vadd.f32 %v608, %v609
          %611 = vst [vmem:[#allocation3] sm:$0x3f] %v610
          %v612 = vld [vmem:[#allocation3] sm:$0x3f]
          %613 = vst [vmem:[#allocation12 + $0x6] sm:$0x3f] %v612
          %v614 = vld [vmem:[#allocation4] sm:$0x3f]
          %v615 = vld [vmem:[#allocation4 + $0x6] sm:$0x3f]
          %v616 = vadd.f32 %v614, %v615
          %617 = vst [vmem:[#allocation4] sm:$0x3f] %v616
          %v618 = vld [vmem:[#allocation4] sm:$0x3f]
          %619 = vst [vmem:[#allocation12 + $0xc] sm:$0x3f] %v618
          %v620 = vld [vmem:[#allocation5] sm:$0x3f]
          %v621 = vld [vmem:[#allocation5 + $0x6] sm:$0x3f]
          %v622 = vadd.f32 %v620, %v621
          %623 = vst [vmem:[#allocation5] sm:$0x3f] %v622
          %v624 = vld [vmem:[#allocation5] sm:$0x3f]
          %625 = vst [vmem:[#allocation12 + $0x12] sm:$0x3f] %v624
          %v626 = vld [vmem:[#allocation6] sm:$0x3f]
          %v627 = vld [vmem:[#allocation6 + $0x6] sm:$0x3f]
          %v628 = vadd.f32 %v626, %v627
          %629 = vst [vmem:[#allocation6] sm:$0x3f] %v628
          %v630 = vld [vmem:[#allocation6] sm:$0x3f]
          %631 = vst [vmem:[#allocation12 + $0x18] sm:$0x3f] %v630
        $region52: #{tpu_custom_call.1} parent=27 // pred_fallthru
          _
        // Predicated region
        $region53: #{tpu_custom_call.1} parent=27 // pred_check
          %p632 = pneg %p106
        $region54: #{tpu_custom_call.1} parent=27 // pred_check_branch
          %634 = sbr.rel (%p632) target = $region56
        $region55: #{tpu_custom_call.1} parent=27 // pred_region
          %s636 = ssub.s32 480, 480
          %637 = vsyncadd [#allocation9], %s636
          %s638 = smul.addr %s24, 15
          %s639 = smul.addr %s638, 32
          %s640 = scalar_lea.hbm %s2, %s639
          %s642 = sshll.u32 [#allocation12], 4
          %s643 = int_to_ptr.vmem [resolvable:$true] %s642
          %645 = dma.vmem_to_hbm [thread:$0]  %s643, 480, %s640, [#allocation9]
        $region56: #{tpu_custom_call.1} parent=27 // pred_fallthru
          _
        // Predicated region
        $region57: #{tpu_custom_call.1} parent=27 // pred_check
          %p646 = pneg %p106
        $region58: #{tpu_custom_call.1} parent=27 // pred_check_branch
          %648 = sbr.rel (%p646) target = $region60
        $region59: #{tpu_custom_call.1} parent=27 // pred_region
          %649 = dma.done [#allocation9], 480
        $region60: #{tpu_custom_call.1} parent=27 // pred_fallthru
          _
      $region28: #{tpu_custom_call.1} parent=5 // pred_fallthru
        _
      %p650 = scmp.le.s32.totalorder 2, %s15
      // Predicated region
      $region61: #{tpu_custom_call.1} parent=5 // pred_check
        %p651 = pneg %p650
      $region62: #{tpu_custom_call.1} parent=5 // pred_check_branch
        %653 = sbr.rel (%p651) target = $region64
      $region63: #{tpu_custom_call.1} parent=5 // pred_region
        %s654 = ssub.s32 %s15, 2
      $region64: #{tpu_custom_call.1} parent=5 // pred_fallthru
        _
    $region6: #{tpu_custom_call.1} parent=1 // loop_footer
      %s19 = sadd.s32 1, %s15
    $region7: #{tpu_custom_call.1} parent=1 // loop_footer_branch
      %14 = sbr.rel target = $region3
    $region8: #{tpu_custom_call.1} parent=1 // loop_exit
      _
    %655 = vsyncpa [#allocation8], 1
    %s656 = scalar_lea.sflag [#allocation8], 1
    %657 = vsyncpa %s656, 1
    %658 = vsyncpa [#allocation11], 1
    %s659 = scalar_lea.sflag [#allocation11], 1
    %660 = vsyncpa %s659, 1
    %661 = vsyncpa [#allocation9], 1
    %s662 = scalar_lea.sflag [#allocation9], 1
    %663 = vsyncpa %s662, 1

</llo_original>
